<compile_context>
chip_gen: v7x
topology: tpu7x:2x2x1
jax: 0.10.0
libtpu: 0.0.40
codegen_flags: <defaults>
</compile_context>

<pallas_src>
import jax
import jax.numpy as jnp
from jax.experimental import pallas as pl
from jax.experimental.pallas import tpu as pltpu


def _dma_copy_kernel(x_hbm, o_hbm, sem):
    # Whole-array HBM -> HBM copy via one async DMA.
    copy = pltpu.make_async_copy(x_hbm, o_hbm, sem)
    copy.start()
    copy.wait()


def _resolve_view_shape(total, shape):
    """Resolve a torch.view-style target shape (supports a single -1)."""
    shape = list(shape)
    neg = [i for i, s in enumerate(shape) if s == -1]
    if len(neg) > 1:
        raise ValueError("only one dimension can be inferred (-1)")
    if neg:
        idx = neg[0]
        known = 1
        for i, s in enumerate(shape):
            if i != idx:
                known *= s
        if known == 0 or total % known != 0:
            raise ValueError(
                f"cannot view array of {total} elements as shape {tuple(shape)}")
        shape[idx] = total // known
    prod = 1
    for s in shape:
        prod *= s
    if prod != total:
        raise ValueError(
            f"shape {tuple(shape)} is invalid for input of {total} elements")
    return tuple(shape)


def pallas_reshape(x, *shape):
    """Equivalent of torch.Tensor.view(*shape), data moved by one HBM->HBM DMA.

    NOTE: the metadata-only (zero HBM traffic) equivalent is just
    `x.reshape(out_shape)`; the Pallas kernel below performs the copy
    explicitly, but in the cheapest possible way (single DMA, no VMEM staging).
    """
    out_shape = _resolve_view_shape(x.size, shape)

    # Row-major contiguous reshape of the operand is metadata-only glue; the
    # kernel then copies src -> dst with identical shapes.
    x_t = x.reshape(out_shape)

    return pl.pallas_call(
        _dma_copy_kernel,
        out_shape=jax.ShapeDtypeStruct(out_shape, x.dtype),
        in_specs=[pl.BlockSpec(memory_space=pl.ANY)],   # raw HBM ref, no auto-DMA
        out_specs=pl.BlockSpec(memory_space=pl.ANY),    # raw HBM ref, no auto-DMA
        scratch_shapes=[pltpu.SemaphoreType.DMA],
    )(x_t)


if __name__ == "__main__":
    key = jax.random.PRNGKey(0)

    # Small NCHW input consistent with a conv-style pipeline.
    x = jax.random.normal(key, (2, 4, 16, 16), dtype=jnp.float32)

    # Reshape(2, -1): flatten per-batch, the common use of this module.
    y = jax.block_until_ready(pallas_reshape(x, 2, -1))
    ref = x.reshape(2, -1)
    assert y.shape == ref.shape, (y.shape, ref.shape)
    assert y.dtype == ref.dtype
    assert bool(jnp.all(y == ref)), "reshape mismatch"

    # Multi-axis target shape: Reshape(2, 4, 256).
    y2 = jax.block_until_ready(pallas_reshape(x, 2, 4, 256))
    assert bool(jnp.all(y2 == x.reshape(2, 4, 256)))

    # Odd-sized, non-128-multiple element count: no padding/concat path needed.
    x3 = jax.random.normal(key, (3, 5, 7), dtype=jnp.float32)
    y3 = jax.block_until_ready(pallas_reshape(x3, -1))
    assert y3.shape == (105,)
    assert bool(jnp.all(y3 == x3.reshape(105)))

    print("KERNEL_OK")
</pallas_src>

<mosaic_0001>
module attributes {stable_mosaic.version = 11 : i64} {
  func.func @_dma_copy_kernel(%arg0: memref<2x1024xf32, #tpu.memory_space<any>>, %arg1: memref<2x1024xf32, #tpu.memory_space<any>>, %arg2: memref<!tpu.dma_semaphore, #tpu.memory_space<semaphore_mem>>) attributes {dimension_semantics = [], scalar_prefetch = 0 : i64, scratch_operands = 1 : i64, tpu.core_type = #tpu.core_type<tc>} {
    tpu.enqueue_dma source(%arg0 : memref<2x1024xf32, #tpu.memory_space<any>>) target(%arg1 : memref<2x1024xf32, #tpu.memory_space<any>>) target_semaphore(%arg2 : memref<!tpu.dma_semaphore, #tpu.memory_space<semaphore_mem>>)
    tpu.wait_dma2 semaphore(%arg2 : memref<!tpu.dma_semaphore, #tpu.memory_space<semaphore_mem>>) src(%arg0 : memref<2x1024xf32, #tpu.memory_space<any>>) dst(%arg1 : memref<2x1024xf32, #tpu.memory_space<any>>)
    return
  }
}

</mosaic_0001>

<llo_original>
// kernel: tpu_custom_call.1
$region0: #{tpu_custom_call.1}
  #allocation0 [shape = 'u32[]', space=smem, size = 0x4, offset = 0x4, fixed_abs, tag = 'smem constant byte address 0x4 - core index']
  #allocation1 [shape = 'u32[144,128]{1,0:T(1,128)}', space=vmem, size = 0x12000, scoped, tag = 'internal scratch']
  #allocation2 [shape = 's32[1]{0}', space=sflag, size = 0x4, scoped, tag = 'scratch operand']
  #allocation3 [shape = 's32[]', space=sflag, size = 0x4, offset = 0, fixed_abs, tag = 'sflag constant byte address 0x0 - dummy sync flag']
  #allocation4 [shape = 'u32[0]{0}', space=smem, size = 0, offset = 0, fixed_abs, tag = 'smem constant byte address 0x0 - null']
  %s0 = inlined_call_operand.hbm [shape: f32[2,1024], index: 0, kind: input, shape index: {}]
  %s1 = inlined_call_operand.hbm [shape: f32[2,1024], index: 1, kind: output, shape index: {}]
  %s2 = sld [smem:[#allocation0]]
  $region2: #{tpu_custom_call.1} parent=0
    _
  %s4 = ssub.s32 1, %s2
  %s5 = scalar_select 0, %s4, %s2
  %s7 = sshll.u32 1, 14
  %s8 = sxor.u32 4294967295, %s7
  %s11 = sshll.u32 3, 24
  %s12 = sxor.u32 4294967295, %s11
  %s13 = sand.u32 0, %s12
  %s15 = sor.u32 %s13, 0
  %18 = dma.general %s0, 256, %s1, [#allocation2], [#allocation3], [#allocation4], %s15, 0
  %s19 = smul.u32 2, 1
  %s20 = smul.u32 %s19, 8
  %s21 = sshll.u32 %s20, 4
  %22 = dma.done [#allocation2], %s21
  %23 = vsyncmov [#allocation2]
  %s24 = vpop.sfrf %23
  %p25 = scmp.eq.s32.totalorder %s24, 0
  %p26 = pneg %p25
  %28 = shalt.err (%p26)

</llo_original>
